<compile_context>
chip_gen: v5e
topology: v5e:2x2
jax: 0.10.0
libtpu: 0.0.40
codegen_flags: <defaults>
</compile_context>

<pallas_src>
import math
from functools import partial

import jax
import jax.numpy as jnp
from jax.experimental import pallas as pl
from jax.experimental.pallas import tpu as pltpu


# ----------------------------------------------------------------------------
# Helpers: padding / tile selection / activation epilogue
# ----------------------------------------------------------------------------
_LANE = 128          # vreg lane width (last dim alignment)
_SUBLANE = 8         # f32 sublane count (second-to-last dim alignment)
_VMEM_BUDGET = 40 * 1024 * 1024   # conservative resident-weight budget (v7x: 64 MiB/TC)
_VMEM_LIMIT = 48 * 1024 * 1024    # scoped VMEM limit requested from Mosaic


def _round_up(n, m):
    return ((n + m - 1) // m) * m


def _choose_tile(dim, pref, align):
    """Tile size (multiple of `align`, capped at `pref`) + padded extent."""
    if dim <= pref:
        tile = _round_up(dim, align)
    else:
        tile = pref
    return tile, _round_up(dim, tile)


def _pad2(x, rows, cols):
    r, c = x.shape
    if r == rows and c == cols:
        return x
    return jnp.pad(x, ((0, rows - r), (0, cols - c)))


def _apply_act(y, act):
    if act == "relu":
        return jnp.maximum(y, 0.0)
    if act == "tanh":
        return jnp.tanh(y)       # EUP slot -> effectively free next to the MXU
    if act == "identity":
        return y
    raise ValueError(f"unknown activation {act}")


# ----------------------------------------------------------------------------
# Kernel 1: per-layer tiled linear + activation  (M, N, K grid + accumulator)
# ----------------------------------------------------------------------------
def _linear_act_kernel(x_ref, w_ref, b_ref, o_ref, acc_ref, *, act):
    k = pl.program_id(2)

    @pl.when(k == 0)
    def _():
        acc_ref[...] = jnp.zeros_like(acc_ref)

    acc_ref[...] += jnp.dot(x_ref[...], w_ref[...],
                            preferred_element_type=jnp.float32)

    @pl.when(k == pl.num_programs(2) - 1)
    def _():
        y = acc_ref[...] + b_ref[...]          # bias + activation only once (epilogue)
        o_ref[...] = _apply_act(y, act).astype(o_ref.dtype)


def linear_act(x, w, b, act="identity"):
    """y = act(x @ w + b) with real (M, N, K) tiling and an f32 accumulator."""
    batch, din = x.shape
    din_w, dout = w.shape
    assert din == din_w

    tm, m_p = _choose_tile(batch, 128, _SUBLANE)
    tn, n_p = _choose_tile(dout, 256, _LANE)
    tk, k_p = _choose_tile(din, 512, _LANE)

    x_p = _pad2(x, m_p, k_p)
    w_p = _pad2(w, k_p, n_p)
    b_p = _pad2(b.reshape(1, dout), 1, n_p)

    out_p = pl.pallas_call(
        partial(_linear_act_kernel, act=act),
        out_shape=jax.ShapeDtypeStruct((m_p, n_p), x.dtype),
        grid_spec=pltpu.PrefetchScalarGridSpec(
            num_scalar_prefetch=0,
            grid=(m_p // tm, n_p // tn, k_p // tk),    # K last (reduction)
            in_specs=[
                pl.BlockSpec((tm, tk), lambda i, j, k: (i, k)),
                pl.BlockSpec((tk, tn), lambda i, j, k: (k, j)),
                pl.BlockSpec((1, tn), lambda i, j, k: (0, j)),   # independent of k
            ],
            out_specs=pl.BlockSpec((tm, tn), lambda i, j, k: (i, j)),
            scratch_shapes=[pltpu.VMEM((tm, tn), jnp.float32)],
        ),
        compiler_params=pltpu.CompilerParams(
            dimension_semantics=("parallel", "parallel", "arbitrary"),
            vmem_limit_bytes=_VMEM_LIMIT,
        ),
    )(x_p, w_p, b_p)
    return out_p[:batch, :dout]


# ----------------------------------------------------------------------------
# Kernel 2: fused whole-Sequential MLP (weights resident in VMEM, batch-tiled)
# ----------------------------------------------------------------------------
def _fused_mlp_kernel(x_ref, *refs, acts):
    o_ref = refs[-1]
    params = refs[:-1]              # w0, b0, w1, b1, ...
    h = x_ref[...]
    for i, act in enumerate(acts):
        w = params[2 * i][...]
        b = params[2 * i + 1][...]
        h = jnp.dot(h, w, preferred_element_type=jnp.float32) + b
        h = _apply_act(h, act)
    o_ref[...] = h.astype(o_ref.dtype)


def _fused_vmem_bytes(tm, dims_p):
    itemsize = 4
    total = 2 * tm * dims_p[0] * itemsize            # x tile (double-buffered)
    total += 2 * tm * dims_p[-1] * itemsize          # out tile (double-buffered)
    for din, dout in zip(dims_p[:-1], dims_p[1:]):
        total += (din * dout + dout) * itemsize      # resident weights + bias
    total += 2 * tm * max(dims_p) * itemsize         # intermediate-activation headroom
    return total


def fused_mlp(x, weights, biases, acts):
    """Run act_n(...act_0(x @ W0 + b0)... @ Wn + bn) in a single pallas_call.

    Returns None if the (padded) weights would not fit the VMEM budget; the
    caller then falls back to per-layer kernels.
    """
    batch, d0 = x.shape
    dims = [d0] + [w.shape[1] for w in weights]
    dims_p = [_round_up(d, _LANE) for d in dims]
    tm, batch_p = _choose_tile(batch, 256, _SUBLANE)

    if _fused_vmem_bytes(tm, dims_p) > _VMEM_BUDGET:
        return None

    x_p = _pad2(x, batch_p, dims_p[0])
    params = []
    in_specs = [pl.BlockSpec((tm, dims_p[0]), lambda i: (i, 0))]
    for li, (w, b) in enumerate(zip(weights, biases)):
        din_p, dout_p = dims_p[li], dims_p[li + 1]
        params.append(_pad2(w, din_p, dout_p))
        params.append(_pad2(b.reshape(1, -1), 1, dout_p))
        # Constant block index => weight/bias DMA'd once, kept resident in VMEM
        # across all batch tiles.
        in_specs.append(pl.BlockSpec((din_p, dout_p), lambda i: (0, 0)))
        in_specs.append(pl.BlockSpec((1, dout_p), lambda i: (0, 0)))

    out_p = pl.pallas_call(
        partial(_fused_mlp_kernel, acts=tuple(acts)),
        out_shape=jax.ShapeDtypeStruct((batch_p, dims_p[-1]), x.dtype),
        grid=(batch_p // tm,),
        in_specs=in_specs,
        out_specs=pl.BlockSpec((tm, dims_p[-1]), lambda i: (i, 0)),
        compiler_params=pltpu.CompilerParams(
            dimension_semantics=("parallel",),      # batch tiles shard across TCs on v7x
            vmem_limit_bytes=_VMEM_LIMIT,
        ),
    )(x_p, *params)
    return out_p[:batch, :dims[-1]]


# ----------------------------------------------------------------------------
# Framework modules (forward-only, Pallas-backed)
# ----------------------------------------------------------------------------
class Module:
    def forward(self, *inputs):
        raise NotImplementedError

    def param(self):
        return []


class Linear(Module):
    def __init__(self, key, in_features, out_features, act="identity"):
        # Uniform +-1/sqrt(in_features) init, same scheme as the mini-framework.
        kw, kb = jax.random.split(key)
        bound = 1.0 / math.sqrt(in_features)
        self.w = jax.random.uniform(
            kw, (in_features, out_features), jnp.float32, -bound, bound
        )
        self.b = jax.random.uniform(
            kb, (out_features,), jnp.float32, -bound, bound
        )
        self.act = act

    def forward(self, x):
        return linear_act(x, self.w, self.b, act=self.act)

    def param(self):
        return [self.w, self.b]


class Sequential(Module):
    def __init__(self, modules_array):
        self.modules_array = modules_array

    def forward(self, x):
        mods = self.modules_array
        if mods and all(isinstance(m, Linear) for m in mods):
            out = fused_mlp(
                x,
                [m.w for m in mods],
                [m.b for m in mods],
                [m.act for m in mods],
            )
            if out is not None:
                return out
        # Fallback: chain per-module (each a tiled Pallas kernel).
        for module in mods:
            x = module.forward(x)
        return x

    # TODO(synk): backward() (reverse-mode chaining) not implemented; forward only.

    def param(self):
        return [m.param() for m in self.modules_array]


# ----------------------------------------------------------------------------
# Reference (plain JAX) for sanity checking
# ----------------------------------------------------------------------------
def _reference_forward(x, layers):
    for layer in layers:
        y = x @ layer.w + layer.b
        y = _apply_act(y, layer.act)
        x = y
    return x


if __name__ == "__main__":
    key = jax.random.PRNGKey(0)
    k_in, k1, k2, k3 = jax.random.split(key, 4)

    batch, d_in, d_hidden, d_out = 8, 32, 32, 32
    x = jax.random.normal(k_in, (batch, d_in), jnp.float32)

    model = Sequential(
        [
            Linear(k1, d_in, d_hidden, act="relu"),
            Linear(k2, d_hidden, d_hidden, act="tanh"),
            Linear(k3, d_hidden, d_out, act="identity"),
        ]
    )

    # Fused-Sequential path (single pallas_call).
    out = jax.block_until_ready(model.forward(x))
    ref = _reference_forward(x, model.modules_array)
    assert out.shape == (batch, d_out)
    assert jnp.allclose(out, ref, atol=1e-4, rtol=1e-4), "fused mismatch vs reference"

    # Standalone per-layer tiled kernel path.
    lin0 = model.modules_array[0]
    out_lin = jax.block_until_ready(lin0.forward(x))
    ref_lin = _apply_act(x @ lin0.w + lin0.b, lin0.act)
    assert jnp.allclose(out_lin, ref_lin, atol=1e-4, rtol=1e-4), "linear mismatch vs reference"

    print("KERNEL_OK")
</pallas_src>

<mosaic_0001>
module attributes {stable_mosaic.version = 11 : i64} {
  func.func @_fused_mlp_kernel(%arg0: i32, %arg1: memref<8x128xf32, #tpu.memory_space<vmem>>, %arg2: memref<128x128xf32, #tpu.memory_space<vmem>>, %arg3: memref<1x128xf32, #tpu.memory_space<vmem>>, %arg4: memref<128x128xf32, #tpu.memory_space<vmem>>, %arg5: memref<1x128xf32, #tpu.memory_space<vmem>>, %arg6: memref<128x128xf32, #tpu.memory_space<vmem>>, %arg7: memref<1x128xf32, #tpu.memory_space<vmem>>, %arg8: memref<8x128xf32, #tpu.memory_space<vmem>>) attributes {dimension_semantics = [#tpu.dimension_semantics<parallel>], iteration_bounds = array<i64: 1>, scalar_prefetch = 0 : i64, scratch_operands = 0 : i64, tpu.core_type = #tpu.core_type<tc>, window_params = [{transform_indices = @transform_0, window_bounds = array<i64: 8, 128>}, {pipeline_mode = #tpu.pipeline_mode<synchronous>, transform_indices = @transform_1, window_bounds = array<i64: 128, 128>}, {pipeline_mode = #tpu.pipeline_mode<synchronous>, transform_indices = @transform_2, window_bounds = array<i64: 1, 128>}, {pipeline_mode = #tpu.pipeline_mode<synchronous>, transform_indices = @transform_3, window_bounds = array<i64: 128, 128>}, {pipeline_mode = #tpu.pipeline_mode<synchronous>, transform_indices = @transform_4, window_bounds = array<i64: 1, 128>}, {pipeline_mode = #tpu.pipeline_mode<synchronous>, transform_indices = @transform_5, window_bounds = array<i64: 128, 128>}, {pipeline_mode = #tpu.pipeline_mode<synchronous>, transform_indices = @transform_6, window_bounds = array<i64: 1, 128>}, {transform_indices = @transform_7, window_bounds = array<i64: 8, 128>}]} {
    %c0 = arith.constant 0 : index
    %c0_0 = arith.constant 0 : index
    %0 = vector.load %arg1[%c0, %c0_0] : memref<8x128xf32, #tpu.memory_space<vmem>>, vector<8x128xf32>
    %c0_1 = arith.constant 0 : index
    %c0_2 = arith.constant 0 : index
    %1 = vector.load %arg2[%c0_1, %c0_2] : memref<128x128xf32, #tpu.memory_space<vmem>>, vector<128x128xf32>
    %c0_3 = arith.constant 0 : index
    %c0_4 = arith.constant 0 : index
    %2 = vector.load %arg3[%c0_3, %c0_4] : memref<1x128xf32, #tpu.memory_space<vmem>>, vector<1x128xf32>
    %cst = arith.constant dense<0.000000e+00> : vector<8x128xf32>
    %3 = tpu.matmul %0, %1, %cst {dimension_numbers = #tpu.dot_dimension_numbers<[1], [0], [0], [1], [0, 0, 1, 1], [], []>} : vector<8x128xf32>, vector<128x128xf32>, vector<8x128xf32> -> vector<8x128xf32>
    %4 = vector.broadcast %2 : vector<1x128xf32> to vector<8x128xf32>
    %5 = arith.addf %3, %4 : vector<8x128xf32>
    %cst_5 = arith.constant 0.000000e+00 : f32
    %6 = vector.broadcast %cst_5 : f32 to vector<8x128xf32>
    %7 = arith.maximumf %5, %6 : vector<8x128xf32>
    %c0_6 = arith.constant 0 : index
    %c0_7 = arith.constant 0 : index
    %8 = vector.load %arg4[%c0_6, %c0_7] : memref<128x128xf32, #tpu.memory_space<vmem>>, vector<128x128xf32>
    %c0_8 = arith.constant 0 : index
    %c0_9 = arith.constant 0 : index
    %9 = vector.load %arg5[%c0_8, %c0_9] : memref<1x128xf32, #tpu.memory_space<vmem>>, vector<1x128xf32>
    %cst_10 = arith.constant dense<0.000000e+00> : vector<8x128xf32>
    %10 = tpu.matmul %7, %8, %cst_10 {dimension_numbers = #tpu.dot_dimension_numbers<[1], [0], [0], [1], [0, 0, 1, 1], [], []>} : vector<8x128xf32>, vector<128x128xf32>, vector<8x128xf32> -> vector<8x128xf32>
    %11 = vector.broadcast %9 : vector<1x128xf32> to vector<8x128xf32>
    %12 = arith.addf %10, %11 : vector<8x128xf32>
    %13 = math.tanh %12 : vector<8x128xf32>
    %c0_11 = arith.constant 0 : index
    %c0_12 = arith.constant 0 : index
    %14 = vector.load %arg6[%c0_11, %c0_12] : memref<128x128xf32, #tpu.memory_space<vmem>>, vector<128x128xf32>
    %c0_13 = arith.constant 0 : index
    %c0_14 = arith.constant 0 : index
    %15 = vector.load %arg7[%c0_13, %c0_14] : memref<1x128xf32, #tpu.memory_space<vmem>>, vector<1x128xf32>
    %cst_15 = arith.constant dense<0.000000e+00> : vector<8x128xf32>
    %16 = tpu.matmul %13, %14, %cst_15 {dimension_numbers = #tpu.dot_dimension_numbers<[1], [0], [0], [1], [0, 0, 1, 1], [], []>} : vector<8x128xf32>, vector<128x128xf32>, vector<8x128xf32> -> vector<8x128xf32>
    %17 = vector.broadcast %15 : vector<1x128xf32> to vector<8x128xf32>
    %18 = arith.addf %16, %17 : vector<8x128xf32>
    %c0_16 = arith.constant 0 : index
    %c0_17 = arith.constant 0 : index
    %19 = vector.load %arg8[%c0_16, %c0_17] : memref<8x128xf32, #tpu.memory_space<vmem>>, vector<8x128xf32>
    tpu.vector_store %arg8[%c0_16, %c0_17], %18 {strides = array<i32>} : memref<8x128xf32, #tpu.memory_space<vmem>>, vector<8x128xf32>,
    return
  }
  func.func @transform_0(%arg0: i32) -> (i32, i32) {
    %c0_i32 = arith.constant 0 : i32
    %c0_i32_0 = arith.constant 0 : i32
    return %arg0, %c0_i32 : i32, i32
  }
  func.func @transform_1(%arg0: i32) -> (i32, i32) {
    %c0_i32 = arith.constant 0 : i32
    %c0_i32_0 = arith.constant 0 : i32
    %c0_i32_1 = arith.constant 0 : i32
    return %c0_i32, %c0_i32_0 : i32, i32
  }
  func.func @transform_2(%arg0: i32) -> (i32, i32) {
    %c0_i32 = arith.constant 0 : i32
    %c0_i32_0 = arith.constant 0 : i32
    %c0_i32_1 = arith.constant 0 : i32
    return %c0_i32, %c0_i32_0 : i32, i32
  }
  func.func @transform_3(%arg0: i32) -> (i32, i32) {
    %c0_i32 = arith.constant 0 : i32
    %c0_i32_0 = arith.constant 0 : i32
    %c0_i32_1 = arith.constant 0 : i32
    return %c0_i32, %c0_i32_0 : i32, i32
  }
  func.func @transform_4(%arg0: i32) -> (i32, i32) {
    %c0_i32 = arith.constant 0 : i32
    %c0_i32_0 = arith.constant 0 : i32
    %c0_i32_1 = arith.constant 0 : i32
    return %c0_i32, %c0_i32_0 : i32, i32
  }
  func.func @transform_5(%arg0: i32) -> (i32, i32) {
    %c0_i32 = arith.constant 0 : i32
    %c0_i32_0 = arith.constant 0 : i32
    %c0_i32_1 = arith.constant 0 : i32
    return %c0_i32, %c0_i32_0 : i32, i32
  }
  func.func @transform_6(%arg0: i32) -> (i32, i32) {
    %c0_i32 = arith.constant 0 : i32
    %c0_i32_0 = arith.constant 0 : i32
    %c0_i32_1 = arith.constant 0 : i32
    return %c0_i32, %c0_i32_0 : i32, i32
  }
  func.func @transform_7(%arg0: i32) -> (i32, i32) {
    %c0_i32 = arith.constant 0 : i32
    %c0_i32_0 = arith.constant 0 : i32
    return %arg0, %c0_i32 : i32, i32
  }
}

</mosaic_0001>

<llo_original>
// kernel: tpu_custom_call.1
$region0: #{tpu_custom_call.1}
  #allocation0 [shape = 'u32[]', space=smem, size = 0x4, offset = 0x4, fixed_abs, tag = 'smem constant byte address 0x4 - core index']
  #allocation1 [shape = 'u32[72,128]{1,0:T(1,128)}', space=vmem, size = 0x9000, scoped, tag = 'internal scratch']
  %s0 = inlined_call_operand.hbm [shape: f32[8,128], index: 0, kind: input, shape index: {}]
  %s1 = inlined_call_operand.hbm [shape: f32[128,128], index: 1, kind: input, shape index: {}]
  %s2 = inlined_call_operand.vmem [shape: f32[1,128], index: 2, kind: input, shape index: {}]
  %s3 = inlined_call_operand.hbm [shape: f32[128,128], index: 3, kind: input, shape index: {}]
  %s4 = inlined_call_operand.vmem [shape: f32[1,128], index: 4, kind: input, shape index: {}]
  %s5 = inlined_call_operand.hbm [shape: f32[128,128], index: 5, kind: input, shape index: {}]
  %s6 = inlined_call_operand.vmem [shape: f32[1,128], index: 6, kind: input, shape index: {}]
  %s7 = inlined_call_operand.hbm [shape: f32[8,128], index: 7, kind: output, shape index: {}]
  %s8 = sld [smem:[#allocation0]]
  $region54: #{tpu_custom_call.1} parent=0
    _
  %s10 = ssub.s32 1, %s8
  %s11 = scalar_select 0, %s10, %s8
  $region1: #{tpu_custom_call.1} parent=0
    #allocation2 [shape = 'u8[4096]{0}', space=vmem, size = 0x1000, scoped, tag = 'input window, operand 0, single buffered']
    #allocation3 [shape = 's32[1]{0}', space=sflag, size = 0x4, scoped, tag = 'scoped memory for tpu_custom_call.1']
    #allocation4 [shape = 's32[1]{0}', space=sflag, size = 0x4, scoped, tag = 'scoped memory for tpu_custom_call.1']
    #allocation5 [shape = 'u8[65536]{0}', space=vmem, size = 0x10000, scoped, tag = 'input window, operand 1, single buffered']
    #allocation6 [shape = 's32[1]{0}', space=sflag, size = 0x4, scoped, tag = 'scoped memory for tpu_custom_call.1']
    #allocation7 [shape = 'u8[65536]{0}', space=vmem, size = 0x10000, scoped, tag = 'input window, operand 3, single buffered']
    #allocation8 [shape = 'u8[65536]{0}', space=vmem, size = 0x10000, scoped, tag = 'input window, operand 5, single buffered']
    #allocation9 [shape = 's32[1]{0}', space=sflag, size = 0x4, scoped, tag = 'scoped memory for tpu_custom_call.1']
    #allocation10 [shape = 'u8[4096]{0}', space=vmem, size = 0x1000, scoped, tag = 'output window, operand 0, single buffered']
    %12 = vsyncpa [#allocation3], 0
    %13 = vsyncpa [#allocation6], 0
    %14 = vsyncpa [#allocation9], 0
    %15 = vsyncpa [#allocation4], 0
    // Predicated region
    $region2: #{tpu_custom_call.1} parent=1 // pred_check
      _
    $region3: #{tpu_custom_call.1} parent=1 // pred_check_branch
      %17 = sbr.rel (0) target = $region5
    $region4: #{tpu_custom_call.1} parent=1 // pred_region
      %19 = vsyncadd [#allocation3], 0
      %s21 = sshll.u32 %s0, 4
      %s22 = int_to_ptr.hbm [resolvable:$true] %s21
      %s23 = sshll.u32 [#allocation2], 4
      %s24 = int_to_ptr.vmem [resolvable:$true] %s23
      %26 = dma.hbm_to_vmem [thread:$0]  %s22, 128, %s24, [#allocation3]
    $region5: #{tpu_custom_call.1} parent=1 // pred_fallthru
      _
    // Predicated region
    $region6: #{tpu_custom_call.1} parent=1 // pred_check
      _
    $region7: #{tpu_custom_call.1} parent=1 // pred_check_branch
      %28 = sbr.rel (0) target = $region9
    $region8: #{tpu_custom_call.1} parent=1 // pred_region
      %30 = vsyncadd [#allocation6], 0
      %s31 = sshll.u32 %s1, 4
      %s32 = int_to_ptr.hbm [resolvable:$true] %s31
      %s33 = sshll.u32 [#allocation5], 4
      %s34 = int_to_ptr.vmem [resolvable:$true] %s33
      %39 = dma.hbm_to_vmem [thread:$0]  %s32, 2048, %s34, [#allocation6], 128, 128, 8
    $region9: #{tpu_custom_call.1} parent=1 // pred_fallthru
      _
    // Predicated region
    $region10: #{tpu_custom_call.1} parent=1 // pred_check
      _
    $region11: #{tpu_custom_call.1} parent=1 // pred_check_branch
      %41 = sbr.rel (0) target = $region13
    $region12: #{tpu_custom_call.1} parent=1 // pred_region
      _
    $region13: #{tpu_custom_call.1} parent=1 // pred_fallthru
      _
    // Predicated region
    $region14: #{tpu_custom_call.1} parent=1 // pred_check
      _
    $region15: #{tpu_custom_call.1} parent=1 // pred_check_branch
      %43 = sbr.rel (0) target = $region17
    $region16: #{tpu_custom_call.1} parent=1 // pred_region
      %45 = vsyncadd [#allocation6], 0
      %s46 = sshll.u32 %s3, 4
      %s47 = int_to_ptr.hbm [resolvable:$true] %s46
      %s48 = sshll.u32 [#allocation7], 4
      %s49 = int_to_ptr.vmem [resolvable:$true] %s48
      %54 = dma.hbm_to_vmem [thread:$0]  %s47, 2048, %s49, [#allocation6], 128, 128, 8
    $region17: #{tpu_custom_call.1} parent=1 // pred_fallthru
      _
    // Predicated region
    $region18: #{tpu_custom_call.1} parent=1 // pred_check
      _
    $region19: #{tpu_custom_call.1} parent=1 // pred_check_branch
      %56 = sbr.rel (0) target = $region21
    $region20: #{tpu_custom_call.1} parent=1 // pred_region
      _
    $region21: #{tpu_custom_call.1} parent=1 // pred_fallthru
      _
    // Predicated region
    $region22: #{tpu_custom_call.1} parent=1 // pred_check
      _
    $region23: #{tpu_custom_call.1} parent=1 // pred_check_branch
      %58 = sbr.rel (0) target = $region25
    $region24: #{tpu_custom_call.1} parent=1 // pred_region
      %60 = vsyncadd [#allocation9], 0
      %s61 = sshll.u32 %s5, 4
      %s62 = int_to_ptr.hbm [resolvable:$true] %s61
      %s63 = sshll.u32 [#allocation8], 4
      %s64 = int_to_ptr.vmem [resolvable:$true] %s63
      %69 = dma.hbm_to_vmem [thread:$0]  %s62, 2048, %s64, [#allocation9], 128, 128, 8
    $region25: #{tpu_custom_call.1} parent=1 // pred_fallthru
      _
    // Predicated region
    $region26: #{tpu_custom_call.1} parent=1 // pred_check
      _
    $region27: #{tpu_custom_call.1} parent=1 // pred_check_branch
      %71 = sbr.rel (0) target = $region29
    $region28: #{tpu_custom_call.1} parent=1 // pred_region
      _
    $region29: #{tpu_custom_call.1} parent=1 // pred_fallthru
      _
    // Predicated region
    $region30: #{tpu_custom_call.1} parent=1 // pred_check
      _
    $region31: #{tpu_custom_call.1} parent=1 // pred_check_branch
      %73 = sbr.rel (0) target = $region33
    $region32: #{tpu_custom_call.1} parent=1 // pred_region
      %75 = dma.done [#allocation3], 128
    $region33: #{tpu_custom_call.1} parent=1 // pred_fallthru
      _
    // Predicated region
    $region34: #{tpu_custom_call.1} parent=1 // pred_check
      _
    $region35: #{tpu_custom_call.1} parent=1 // pred_check_branch
      %77 = sbr.rel (0) target = $region37
    $region36: #{tpu_custom_call.1} parent=1 // pred_region
      %79 = dma.done [#allocation6], 2048
    $region37: #{tpu_custom_call.1} parent=1 // pred_fallthru
      _
    // Predicated region
    $region38: #{tpu_custom_call.1} parent=1 // pred_check
      _
    $region39: #{tpu_custom_call.1} parent=1 // pred_check_branch
      %81 = sbr.rel (0) target = $region41
    $region40: #{tpu_custom_call.1} parent=1 // pred_region
      %83 = dma.done [#allocation6], 2048
    $region41: #{tpu_custom_call.1} parent=1 // pred_fallthru
      _
    // Predicated region
    $region42: #{tpu_custom_call.1} parent=1 // pred_check
      _
    $region43: #{tpu_custom_call.1} parent=1 // pred_check_branch
      %85 = sbr.rel (0) target = $region45
    $region44: #{tpu_custom_call.1} parent=1 // pred_region
      %87 = dma.done [#allocation9], 2048
    $region45: #{tpu_custom_call.1} parent=1 // pred_fallthru
      _
    %v88 = vld [vmem:[#allocation2] sm:$0xff]
    %v89 = vld [vmem:[#allocation5] sm:$0xff]
    %v90 = vld [vmem:[#allocation5 + $0x8] sm:$0xff]
    %v91 = vld [vmem:[#allocation5 + $0x10] sm:$0xff]
    %v92 = vld [vmem:[#allocation5 + $0x18] sm:$0xff]
    %v93 = vld [vmem:[#allocation5 + $0x20] sm:$0xff]
    %v94 = vld [vmem:[#allocation5 + $0x28] sm:$0xff]
    %v95 = vld [vmem:[#allocation5 + $0x30] sm:$0xff]
    %v96 = vld [vmem:[#allocation5 + $0x38] sm:$0xff]
    %v97 = vld [vmem:[#allocation5 + $0x40] sm:$0xff]
    %v98 = vld [vmem:[#allocation5 + $0x48] sm:$0xff]
    %v99 = vld [vmem:[#allocation5 + $0x50] sm:$0xff]
    %v100 = vld [vmem:[#allocation5 + $0x58] sm:$0xff]
    %v101 = vld [vmem:[#allocation5 + $0x60] sm:$0xff]
    %v102 = vld [vmem:[#allocation5 + $0x68] sm:$0xff]
    %v103 = vld [vmem:[#allocation5 + $0x70] sm:$0xff]
    %v104 = vld [vmem:[#allocation5 + $0x78] sm:$0xff]
    %v105 = vld [vmem:[%s2] sm:$0x1]
    %v107 = vperm.slane %v105, 0
    %109 = vmatpush.msra.mxu0 %v104
    %110 = vmatpush.msra.mxu0 %v103
    %111 = vmatpush.msra.mxu0 %v102
    %112 = vmatpush.msra.mxu0 %v101
    %113 = vmatpush.msra.mxu0 %v100
    %114 = vmatpush.msra.mxu0 %v99
    %115 = vmatpush.msra.mxu0 %v98
    %116 = vmatpush.msra.mxu0 %v97
    %117 = vmatpush.msra.mxu0 %v96
    %118 = vmatpush.msra.mxu0 %v95
    %119 = vmatpush.msra.mxu0 %v94
    %120 = vmatpush.msra.mxu0 %v93
    %121 = vmatpush.msra.mxu0 %v92
    %122 = vmatpush.msra.mxu0 %v91
    %123 = vmatpush.msra.mxu0 %v90
    %124 = vmatpush.msra.mxu0 %v89
    %125 = vmatmul.f32.gmra.mxu0 %v88
    %v126 = vpop.f32.mrf.mxu0
    %v127 = vadd.f32 %v107, %v126
    %128 = vdwg.mxu0
    %v129 = vmax.f32 %v127, 0.0
    %v130 = vld [vmem:[#allocation7] sm:$0xff]
    %v131 = vld [vmem:[#allocation7 + $0x8] sm:$0xff]
    %v132 = vld [vmem:[#allocation7 + $0x10] sm:$0xff]
    %v133 = vld [vmem:[#allocation7 + $0x18] sm:$0xff]
    %v134 = vld [vmem:[#allocation7 + $0x20] sm:$0xff]
    %v135 = vld [vmem:[#allocation7 + $0x28] sm:$0xff]
    %v136 = vld [vmem:[#allocation7 + $0x30] sm:$0xff]
    %v137 = vld [vmem:[#allocation7 + $0x38] sm:$0xff]
    %v138 = vld [vmem:[#allocation7 + $0x40] sm:$0xff]
    %v139 = vld [vmem:[#allocation7 + $0x48] sm:$0xff]
    %v140 = vld [vmem:[#allocation7 + $0x50] sm:$0xff]
    %v141 = vld [vmem:[#allocation7 + $0x58] sm:$0xff]
    %v142 = vld [vmem:[#allocation7 + $0x60] sm:$0xff]
    %v143 = vld [vmem:[#allocation7 + $0x68] sm:$0xff]
    %v144 = vld [vmem:[#allocation7 + $0x70] sm:$0xff]
    %v145 = vld [vmem:[#allocation7 + $0x78] sm:$0xff]
    %v146 = vld [vmem:[%s4] sm:$0x1]
    %v148 = vperm.slane %v146, 0
    %150 = vmatpush.msra.mxu0 %v145
    %151 = vmatpush.msra.mxu0 %v144
    %152 = vmatpush.msra.mxu0 %v143
    %153 = vmatpush.msra.mxu0 %v142
    %154 = vmatpush.msra.mxu0 %v141
    %155 = vmatpush.msra.mxu0 %v140
    %156 = vmatpush.msra.mxu0 %v139
    %157 = vmatpush.msra.mxu0 %v138
    %158 = vmatpush.msra.mxu0 %v137
    %159 = vmatpush.msra.mxu0 %v136
    %160 = vmatpush.msra.mxu0 %v135
    %161 = vmatpush.msra.mxu0 %v134
    %162 = vmatpush.msra.mxu0 %v133
    %163 = vmatpush.msra.mxu0 %v132
    %164 = vmatpush.msra.mxu0 %v131
    %165 = vmatpush.msra.mxu0 %v130
    %166 = vmatmul.f32.gmra.mxu0 %v129
    %v167 = vpop.f32.mrf.mxu0
    %v168 = vadd.f32 %v148, %v167
    %169 = vdwg.mxu0
    %v170 = vtanh.pop %v168
    %v171 = vld [vmem:[#allocation8] sm:$0xff]
    %v172 = vld [vmem:[#allocation8 + $0x8] sm:$0xff]
    %v173 = vld [vmem:[#allocation8 + $0x10] sm:$0xff]
    %v174 = vld [vmem:[#allocation8 + $0x18] sm:$0xff]
    %v175 = vld [vmem:[#allocation8 + $0x20] sm:$0xff]
    %v176 = vld [vmem:[#allocation8 + $0x28] sm:$0xff]
    %v177 = vld [vmem:[#allocation8 + $0x30] sm:$0xff]
    %v178 = vld [vmem:[#allocation8 + $0x38] sm:$0xff]
    %v179 = vld [vmem:[#allocation8 + $0x40] sm:$0xff]
    %v180 = vld [vmem:[#allocation8 + $0x48] sm:$0xff]
    %v181 = vld [vmem:[#allocation8 + $0x50] sm:$0xff]
    %v182 = vld [vmem:[#allocation8 + $0x58] sm:$0xff]
    %v183 = vld [vmem:[#allocation8 + $0x60] sm:$0xff]
    %v184 = vld [vmem:[#allocation8 + $0x68] sm:$0xff]
    %v185 = vld [vmem:[#allocation8 + $0x70] sm:$0xff]
    %v186 = vld [vmem:[#allocation8 + $0x78] sm:$0xff]
    %v187 = vld [vmem:[%s6] sm:$0x1]
    %v189 = vperm.slane %v187, 0
    %191 = vmatpush.msra.mxu0 %v186
    %192 = vmatpush.msra.mxu0 %v185
    %193 = vmatpush.msra.mxu0 %v184
    %194 = vmatpush.msra.mxu0 %v183
    %195 = vmatpush.msra.mxu0 %v182
    %196 = vmatpush.msra.mxu0 %v181
    %197 = vmatpush.msra.mxu0 %v180
    %198 = vmatpush.msra.mxu0 %v179
    %199 = vmatpush.msra.mxu0 %v178
    %200 = vmatpush.msra.mxu0 %v177
    %201 = vmatpush.msra.mxu0 %v176
    %202 = vmatpush.msra.mxu0 %v175
    %203 = vmatpush.msra.mxu0 %v174
    %204 = vmatpush.msra.mxu0 %v173
    %205 = vmatpush.msra.mxu0 %v172
    %206 = vmatpush.msra.mxu0 %v171
    %207 = vmatmul.f32.gmra.mxu0 %v170
    %v208 = vpop.f32.mrf.mxu0
    %v209 = vadd.f32 %v189, %v208
    %210 = vdwg.mxu0
    %211 = vst [vmem:[#allocation10] sm:$0xff] %v209
    // Predicated region
    $region46: #{tpu_custom_call.1} parent=1 // pred_check
      _
    $region47: #{tpu_custom_call.1} parent=1 // pred_check_branch
      %213 = sbr.rel (0) target = $region49
    $region48: #{tpu_custom_call.1} parent=1 // pred_region
      %215 = vsyncadd [#allocation4], 0
      %s217 = sshll.u32 [#allocation10], 4
      %s218 = int_to_ptr.vmem [resolvable:$true] %s217
      %s219 = sshll.u32 %s7, 4
      %s220 = int_to_ptr.hbm [resolvable:$true] %s219
      %222 = dma.vmem_to_hbm [thread:$0]  %s218, 128, %s220, [#allocation4]
    $region49: #{tpu_custom_call.1} parent=1 // pred_fallthru
      _
    // Predicated region
    $region50: #{tpu_custom_call.1} parent=1 // pred_check
      _
    $region51: #{tpu_custom_call.1} parent=1 // pred_check_branch
      %224 = sbr.rel (0) target = $region53
    $region52: #{tpu_custom_call.1} parent=1 // pred_region
      %226 = dma.done [#allocation4], 128
    $region53: #{tpu_custom_call.1} parent=1 // pred_fallthru
      _
    %227 = vsyncpa [#allocation3], 1
    %228 = vsyncpa [#allocation6], 1
    %229 = vsyncpa [#allocation9], 1
    %230 = vsyncpa [#allocation4], 1

</llo_original>
